<compile_context>
chip_gen: v7x
topology: tpu7x:2x2x1
jax: 0.10.0
libtpu: 0.0.40
codegen_flags: <defaults>
</compile_context>

<pallas_src>
import functools

import jax
import jax.numpy as jnp
from jax.experimental import pallas as pl
from jax.experimental.pallas import tpu as pltpu


# ---------------------------------------------------------------------------
# Kernels
# ---------------------------------------------------------------------------
def _biasfree_ln_kernel(c_true, x_ref, w_ref, o_ref):
    # x_ref: (block_rows, Cp) tile; w_ref: (1, Cp) full (zero-padded) weight.
    x = x_ref[...].astype(jnp.float32)
    inv_c = 1.0 / c_true                                   # trace-time constant
    # Fused single-sweep moments; channel padding is zero so sums are exact.
    m1 = jnp.sum(x, axis=-1, keepdims=True) * inv_c        # E[x]
    m2 = jnp.sum(x * x, axis=-1, keepdims=True) * inv_c    # E[x^2]
    var = m2 - m1 * m1                                     # biased variance
    inv = jax.lax.rsqrt(var + 1e-5)
    w = w_ref[...].astype(jnp.float32)
    o_ref[...] = (x * inv * w).astype(o_ref.dtype)         # NOT mean-centered


def _withbias_ln_kernel(c_true, x_ref, w_ref, b_ref, o_ref):
    x = x_ref[...].astype(jnp.float32)
    inv_c = 1.0 / c_true
    mu = jnp.sum(x, axis=-1, keepdims=True) * inv_c
    m2 = jnp.sum(x * x, axis=-1, keepdims=True) * inv_c
    var = m2 - mu * mu
    inv = jax.lax.rsqrt(var + 1e-5)
    w = w_ref[...].astype(jnp.float32)
    b = b_ref[...].astype(jnp.float32)
    o_ref[...] = ((x - mu) * inv * w + b).astype(o_ref.dtype)


# ---------------------------------------------------------------------------
# Tiling helpers
# ---------------------------------------------------------------------------
def _round_up(n, m):
    return ((n + m - 1) // m) * m


def _choose_block_rows(rows, c_padded, itemsize,
                       vmem_tile_budget=20 * 1024 * 1024, max_rows=2048):
    """Largest row tile whose in+out double-buffered copies fit the budget."""
    bytes_per_row = 4 * c_padded * itemsize      # 2 tiles (in+out) x 2 buffers
    target = vmem_tile_budget // bytes_per_row
    # sublane packing: 8 rows/vreg for 4B dtypes, 16 for 2B, 32 for 1B
    row_align = 8 * max(1, 4 // itemsize)
    target = max(row_align, min(int(target), max_rows))
    target = (target // row_align) * row_align
    rows_aligned = _round_up(max(rows, 1), row_align)
    return min(target, rows_aligned)


# ---------------------------------------------------------------------------
# Row-wise wrapper: x2 is (rows, C), normalization over the last dim
# ---------------------------------------------------------------------------
def _layernorm_rows(x2, weight, bias=None):
    rows, C = x2.shape
    itemsize = jnp.dtype(x2.dtype).itemsize

    # Lane-dense channel dim (multiple of 128); sums inside the kernel divide
    # by the true C, so zero padding does not change the result.
    Cp = _round_up(C, 128)
    block_rows = _choose_block_rows(rows, Cp, itemsize)
    rows_p = _round_up(rows, block_rows)

    xp = x2
    if rows_p != rows or Cp != C:
        xp = jnp.pad(x2, ((0, rows_p - rows), (0, Cp - C)))
    wp = jnp.pad(weight.reshape(1, C), ((0, 0), (0, Cp - C)))

    in_specs = [
        pl.BlockSpec((block_rows, Cp), lambda i: (i, 0)),
        pl.BlockSpec((1, Cp), lambda i: (0, 0)),
    ]
    args = [xp, wp]
    if bias is None:
        kernel = functools.partial(_biasfree_ln_kernel, float(C))
    else:
        bp = jnp.pad(bias.reshape(1, C), ((0, 0), (0, Cp - C)))
        in_specs.append(pl.BlockSpec((1, Cp), lambda i: (0, 0)))
        args.append(bp)
        kernel = functools.partial(_withbias_ln_kernel, float(C))

    out = pl.pallas_call(
        kernel,
        out_shape=jax.ShapeDtypeStruct((rows_p, Cp), x2.dtype),
        grid_spec=pltpu.PrefetchScalarGridSpec(
            num_scalar_prefetch=0,
            grid=(rows_p // block_rows,),
            in_specs=in_specs,
            out_specs=pl.BlockSpec((block_rows, Cp), lambda i: (i, 0)),
        ),
        compiler_params=pltpu.CompilerParams(
            dimension_semantics=("parallel",),      # Megacore on v7x; no-op v5e/v6e
            vmem_limit_bytes=32 * 1024 * 1024,      # headroom over 16/32 MiB defaults
        ),
    )(*args)
    return out[:rows, :C]


# ---------------------------------------------------------------------------
# Module-level forwards (match the PyTorch classes)
# ---------------------------------------------------------------------------
def biasfree_layernorm(x, weight):
    """x: (..., C); weight: (C,). BiasFree_LayerNorm.forward."""
    shp = x.shape
    C = shp[-1]
    rows = 1
    for d in shp[:-1]:
        rows *= d
    return _layernorm_rows(x.reshape(rows, C), weight).reshape(shp)


def withbias_layernorm(x, weight, bias):
    """x: (..., C); weight, bias: (C,). WithBias_LayerNorm.forward."""
    shp = x.shape
    C = shp[-1]
    rows = 1
    for d in shp[:-1]:
        rows *= d
    return _layernorm_rows(x.reshape(rows, C), weight, bias).reshape(shp)


def layernorm(x, weight, bias=None, layer_norm_type="BiasFree"):
    """LayerNorm.forward: x is (B, C, H, W); normalization over C."""
    B, C, H, W = x.shape
    # to_3d: 'b c h w -> b (h w) c', flattened to rows
    x_rows = jnp.transpose(x, (0, 2, 3, 1)).reshape(B * H * W, C)
    if layer_norm_type == "BiasFree":
        y = _layernorm_rows(x_rows, weight, None)
    else:
        y = _layernorm_rows(x_rows, weight, bias)
    # to_4d: 'b (h w) c -> b c h w'
    return jnp.transpose(y.reshape(B, H, W, C), (0, 3, 1, 2))


# ---------------------------------------------------------------------------
# Self-test
# ---------------------------------------------------------------------------
if __name__ == "__main__":
    key = jax.random.PRNGKey(0)

    def _ref_3d(x, weight, bias):
        var = jnp.var(x, axis=-1, keepdims=True)            # unbiased=False
        if bias is None:
            return x / jnp.sqrt(var + 1e-5) * weight
        mu = jnp.mean(x, axis=-1, keepdims=True)
        return (x - mu) / jnp.sqrt(var + 1e-5) * weight + bias

    def _check(B, C, H, W, sub):
        x = jax.random.normal(sub, (B, C, H, W), dtype=jnp.float32)
        weight = jnp.ones((C,), dtype=jnp.float32)           # torch.ones init
        bias = jnp.zeros((C,), dtype=jnp.float32)            # torch.zeros init

        out_bf = layernorm(x, weight, None, layer_norm_type="BiasFree")
        out_wb = layernorm(x, weight, bias, layer_norm_type="WithBias")
        jax.block_until_ready((out_bf, out_wb))

        x3 = jnp.transpose(x, (0, 2, 3, 1)).reshape(B, H * W, C)
        ref_bf = jnp.transpose(
            _ref_3d(x3, weight, None).reshape(B, H, W, C), (0, 3, 1, 2))
        ref_wb = jnp.transpose(
            _ref_3d(x3, weight, bias).reshape(B, H, W, C), (0, 3, 1, 2))

        assert jnp.allclose(out_bf, ref_bf, atol=2e-5, rtol=1e-5), "BiasFree mismatch"
        assert jnp.allclose(out_wb, ref_wb, atol=2e-5, rtol=1e-5), "WithBias mismatch"

    k1, k2 = jax.random.split(key)
    _check(2, 4, 16, 16, k1)    # shape implied by the module (dim=4)
    _check(1, 4, 13, 13, k2)    # non-divisible row count -> exercises row padding

    print("KERNEL_OK")
</pallas_src>

<mosaic_0001>
module attributes {stable_mosaic.version = 11 : i64} {
  func.func @_biasfree_ln_kernel(%arg0: i32, %arg1: memref<512x128xf32, #tpu.memory_space<vmem>>, %arg2: memref<1x128xf32, #tpu.memory_space<vmem>>, %arg3: memref<512x128xf32, #tpu.memory_space<vmem>>) attributes {dimension_semantics = [#tpu.dimension_semantics<parallel>], iteration_bounds = array<i64: 1>, scalar_prefetch = 0 : i64, scratch_operands = 0 : i64, tpu.core_type = #tpu.core_type<tc>, window_params = [{transform_indices = @transform_0, window_bounds = array<i64: 512, 128>}, {pipeline_mode = #tpu.pipeline_mode<synchronous>, transform_indices = @transform_1, window_bounds = array<i64: 1, 128>}, {transform_indices = @transform_2, window_bounds = array<i64: 512, 128>}]} {
    %c0 = arith.constant 0 : index
    %c0_0 = arith.constant 0 : index
    %0 = vector.load %arg1[%c0, %c0_0] : memref<512x128xf32, #tpu.memory_space<vmem>>, vector<512x128xf32>
    %cst = arith.constant dense<0.000000e+00> : vector<512xf32>
    %1 = vector.multi_reduction <add>, %0, %cst [1] : vector<512x128xf32> to vector<512xf32>
    %2 = vector.shape_cast %1 : vector<512xf32> to vector<512x1xf32>
    %cst_1 = arith.constant 2.500000e-01 : f32
    %3 = vector.broadcast %cst_1 : f32 to vector<512x1xf32>
    %4 = arith.mulf %2, %3 : vector<512x1xf32>
    %5 = arith.mulf %0, %0 : vector<512x128xf32>
    %cst_2 = arith.constant dense<0.000000e+00> : vector<512xf32>
    %6 = vector.multi_reduction <add>, %5, %cst_2 [1] : vector<512x128xf32> to vector<512xf32>
    %7 = vector.shape_cast %6 : vector<512xf32> to vector<512x1xf32>
    %cst_3 = arith.constant 2.500000e-01 : f32
    %8 = vector.broadcast %cst_3 : f32 to vector<512x1xf32>
    %9 = arith.mulf %7, %8 : vector<512x1xf32>
    %10 = arith.mulf %4, %4 : vector<512x1xf32>
    %11 = arith.subf %9, %10 : vector<512x1xf32>
    %cst_4 = arith.constant 9.99999974E-6 : f32
    %12 = vector.broadcast %cst_4 : f32 to vector<512x1xf32>
    %13 = arith.addf %11, %12 : vector<512x1xf32>
    %14 = math.rsqrt %13 : vector<512x1xf32>
    %c0_5 = arith.constant 0 : index
    %c0_6 = arith.constant 0 : index
    %15 = vector.load %arg2[%c0_5, %c0_6] : memref<1x128xf32, #tpu.memory_space<vmem>>, vector<1x128xf32>
    %16 = vector.broadcast %14 : vector<512x1xf32> to vector<512x128xf32>
    %17 = arith.mulf %0, %16 : vector<512x128xf32>
    %18 = vector.broadcast %15 : vector<1x128xf32> to vector<512x128xf32>
    %19 = arith.mulf %17, %18 : vector<512x128xf32>
    %c0_7 = arith.constant 0 : index
    %c0_8 = arith.constant 0 : index
    %20 = vector.load %arg3[%c0_7, %c0_8] : memref<512x128xf32, #tpu.memory_space<vmem>>, vector<512x128xf32>
    tpu.vector_store %arg3[%c0_7, %c0_8], %19 {strides = array<i32>} : memref<512x128xf32, #tpu.memory_space<vmem>>, vector<512x128xf32>,
    return
  }
  func.func @transform_0(%arg0: i32) -> (i32, i32) {
    %c0_i32 = arith.constant 0 : i32
    %c0_i32_0 = arith.constant 0 : i32
    return %arg0, %c0_i32 : i32, i32
  }
  func.func @transform_1(%arg0: i32) -> (i32, i32) {
    %c0_i32 = arith.constant 0 : i32
    %c0_i32_0 = arith.constant 0 : i32
    %c0_i32_1 = arith.constant 0 : i32
    return %c0_i32, %c0_i32_0 : i32, i32
  }
  func.func @transform_2(%arg0: i32) -> (i32, i32) {
    %c0_i32 = arith.constant 0 : i32
    %c0_i32_0 = arith.constant 0 : i32
    return %arg0, %c0_i32 : i32, i32
  }
}

</mosaic_0001>

<llo_original>
// kernel: tpu_custom_call.1
$region0: #{tpu_custom_call.1}
  #allocation0 [shape = 'u32[]', space=smem, size = 0x4, offset = 0x4, fixed_abs, tag = 'smem constant byte address 0x4 - core index']
  #allocation1 [shape = 'u32[144,128]{1,0:T(1,128)}', space=vmem, size = 0x12000, scoped, tag = 'internal scratch']
  %s0 = inlined_call_operand.hbm [shape: f32[512,128], index: 0, kind: input, shape index: {}]
  %s1 = inlined_call_operand.vmem [shape: f32[1,128], index: 1, kind: input, shape index: {}]
  %s2 = inlined_call_operand.hbm [shape: f32[512,128], index: 2, kind: output, shape index: {}]
  %s3 = sld [smem:[#allocation0]]
  $region22: #{tpu_custom_call.1} parent=0
    _
  %s5 = ssub.s32 1, %s3
  %s6 = scalar_select 0, %s5, %s3
  $region1: #{tpu_custom_call.1} parent=0
    #allocation2 [shape = 'u8[262144]{0}', space=vmem, size = 0x40000, scoped, tag = 'input window, operand 0, single buffered']
    #allocation3 [shape = 's32[1]{0}', space=sflag, size = 0x4, scoped, tag = 'scoped memory for tpu_custom_call.1']
    #allocation4 [shape = 's32[1]{0}', space=sflag, size = 0x4, scoped, tag = 'scoped memory for tpu_custom_call.1']
    #allocation5 [shape = 'u8[262144]{0}', space=vmem, size = 0x40000, scoped, tag = 'output window, operand 0, single buffered']
    %7 = vsyncpa [#allocation3], 0
    %8 = vsyncpa [#allocation4], 0
    // Predicated region
    $region2: #{tpu_custom_call.1} parent=1 // pred_check
      _
    $region3: #{tpu_custom_call.1} parent=1 // pred_check_branch
      %10 = sbr.rel (0) target = $region5
    $region4: #{tpu_custom_call.1} parent=1 // pred_region
      %s12 = ssub.s32 8192, 8192
      %13 = vsyncadd [#allocation3], %s12
      %s14 = sshll.u32 [#allocation2], 4
      %s15 = int_to_ptr.vmem [resolvable:$true] %s14
      %20 = dma.hbm_to_vmem [thread:$0]  %s0, 8192, %s15, [#allocation3], 128, 128, 8
    $region5: #{tpu_custom_call.1} parent=1 // pred_fallthru
      _
    // Predicated region
    $region6: #{tpu_custom_call.1} parent=1 // pred_check
      _
    $region7: #{tpu_custom_call.1} parent=1 // pred_check_branch
      %22 = sbr.rel (0) target = $region9
    $region8: #{tpu_custom_call.1} parent=1 // pred_region
      _
    $region9: #{tpu_custom_call.1} parent=1 // pred_fallthru
      _
    // Predicated region
    $region10: #{tpu_custom_call.1} parent=1 // pred_check
      _
    $region11: #{tpu_custom_call.1} parent=1 // pred_check_branch
      %24 = sbr.rel (0) target = $region13
    $region12: #{tpu_custom_call.1} parent=1 // pred_region
      %25 = dma.done [#allocation3], 8192
    $region13: #{tpu_custom_call.1} parent=1 // pred_fallthru
      _
    %v26 = vld [vmem:[#allocation2] sm:$0xff]
    %v27 = vld [vmem:[#allocation2 + $0x8] sm:$0xff]
    %v28 = vld [vmem:[#allocation2 + $0x10] sm:$0xff]
    %v29 = vld [vmem:[#allocation2 + $0x18] sm:$0xff]
    %v30 = vld [vmem:[#allocation2 + $0x20] sm:$0xff]
    %v31 = vld [vmem:[#allocation2 + $0x28] sm:$0xff]
    %v32 = vld [vmem:[#allocation2 + $0x30] sm:$0xff]
    %v33 = vld [vmem:[#allocation2 + $0x38] sm:$0xff]
    %v34 = vld [vmem:[#allocation2 + $0x40] sm:$0xff]
    %v35 = vld [vmem:[#allocation2 + $0x48] sm:$0xff]
    %v36 = vld [vmem:[#allocation2 + $0x50] sm:$0xff]
    %v37 = vld [vmem:[#allocation2 + $0x58] sm:$0xff]
    %v38 = vld [vmem:[#allocation2 + $0x60] sm:$0xff]
    %v39 = vld [vmem:[#allocation2 + $0x68] sm:$0xff]
    %v40 = vld [vmem:[#allocation2 + $0x70] sm:$0xff]
    %v41 = vld [vmem:[#allocation2 + $0x78] sm:$0xff]
    %v42 = vld [vmem:[#allocation2 + $0x80] sm:$0xff]
    %v43 = vld [vmem:[#allocation2 + $0x88] sm:$0xff]
    %v44 = vld [vmem:[#allocation2 + $0x90] sm:$0xff]
    %v45 = vld [vmem:[#allocation2 + $0x98] sm:$0xff]
    %v46 = vld [vmem:[#allocation2 + $0xa0] sm:$0xff]
    %v47 = vld [vmem:[#allocation2 + $0xa8] sm:$0xff]
    %v48 = vld [vmem:[#allocation2 + $0xb0] sm:$0xff]
    %v49 = vld [vmem:[#allocation2 + $0xb8] sm:$0xff]
    %v50 = vld [vmem:[#allocation2 + $0xc0] sm:$0xff]
    %v51 = vld [vmem:[#allocation2 + $0xc8] sm:$0xff]
    %v52 = vld [vmem:[#allocation2 + $0xd0] sm:$0xff]
    %v53 = vld [vmem:[#allocation2 + $0xd8] sm:$0xff]
    %v54 = vld [vmem:[#allocation2 + $0xe0] sm:$0xff]
    %v55 = vld [vmem:[#allocation2 + $0xe8] sm:$0xff]
    %v56 = vld [vmem:[#allocation2 + $0xf0] sm:$0xff]
    %v57 = vld [vmem:[#allocation2 + $0xf8] sm:$0xff]
    %v58 = vld [vmem:[#allocation2 + $0x100] sm:$0xff]
    %v59 = vld [vmem:[#allocation2 + $0x108] sm:$0xff]
    %v60 = vld [vmem:[#allocation2 + $0x110] sm:$0xff]
    %v61 = vld [vmem:[#allocation2 + $0x118] sm:$0xff]
    %v62 = vld [vmem:[#allocation2 + $0x120] sm:$0xff]
    %v63 = vld [vmem:[#allocation2 + $0x128] sm:$0xff]
    %v64 = vld [vmem:[#allocation2 + $0x130] sm:$0xff]
    %v65 = vld [vmem:[#allocation2 + $0x138] sm:$0xff]
    %v66 = vld [vmem:[#allocation2 + $0x140] sm:$0xff]
    %v67 = vld [vmem:[#allocation2 + $0x148] sm:$0xff]
    %v68 = vld [vmem:[#allocation2 + $0x150] sm:$0xff]
    %v69 = vld [vmem:[#allocation2 + $0x158] sm:$0xff]
    %v70 = vld [vmem:[#allocation2 + $0x160] sm:$0xff]
    %v71 = vld [vmem:[#allocation2 + $0x168] sm:$0xff]
    %v72 = vld [vmem:[#allocation2 + $0x170] sm:$0xff]
    %v73 = vld [vmem:[#allocation2 + $0x178] sm:$0xff]
    %v74 = vld [vmem:[#allocation2 + $0x180] sm:$0xff]
    %v75 = vld [vmem:[#allocation2 + $0x188] sm:$0xff]
    %v76 = vld [vmem:[#allocation2 + $0x190] sm:$0xff]
    %v77 = vld [vmem:[#allocation2 + $0x198] sm:$0xff]
    %v78 = vld [vmem:[#allocation2 + $0x1a0] sm:$0xff]
    %v79 = vld [vmem:[#allocation2 + $0x1a8] sm:$0xff]
    %v80 = vld [vmem:[#allocation2 + $0x1b0] sm:$0xff]
    %v81 = vld [vmem:[#allocation2 + $0x1b8] sm:$0xff]
    %v82 = vld [vmem:[#allocation2 + $0x1c0] sm:$0xff]
    %v83 = vld [vmem:[#allocation2 + $0x1c8] sm:$0xff]
    %v84 = vld [vmem:[#allocation2 + $0x1d0] sm:$0xff]
    %v85 = vld [vmem:[#allocation2 + $0x1d8] sm:$0xff]
    %v86 = vld [vmem:[#allocation2 + $0x1e0] sm:$0xff]
    %v87 = vld [vmem:[#allocation2 + $0x1e8] sm:$0xff]
    %v88 = vld [vmem:[#allocation2 + $0x1f0] sm:$0xff]
    %v89 = vld [vmem:[#allocation2 + $0x1f8] sm:$0xff]
    %90 = vadd.xlane.f32.xlu0 %v26
    %v91 = vpop.xlane.xlu0 %90
    %92 = vadd.xlane.f32.xlu0 %v27
    %v93 = vpop.xlane.xlu0 %92
    %94 = vadd.xlane.f32.xlu0 %v28
    %v95 = vpop.xlane.xlu0 %94
    %96 = vadd.xlane.f32.xlu0 %v29
    %v97 = vpop.xlane.xlu0 %96
    %98 = vadd.xlane.f32.xlu0 %v30
    %v99 = vpop.xlane.xlu0 %98
    %100 = vadd.xlane.f32.xlu0 %v31
    %v101 = vpop.xlane.xlu0 %100
    %102 = vadd.xlane.f32.xlu0 %v32
    %v103 = vpop.xlane.xlu0 %102
    %104 = vadd.xlane.f32.xlu0 %v33
    %v105 = vpop.xlane.xlu0 %104
    %106 = vadd.xlane.f32.xlu0 %v34
    %v107 = vpop.xlane.xlu0 %106
    %108 = vadd.xlane.f32.xlu0 %v35
    %v109 = vpop.xlane.xlu0 %108
    %110 = vadd.xlane.f32.xlu0 %v36
    %v111 = vpop.xlane.xlu0 %110
    %112 = vadd.xlane.f32.xlu0 %v37
    %v113 = vpop.xlane.xlu0 %112
    %114 = vadd.xlane.f32.xlu0 %v38
    %v115 = vpop.xlane.xlu0 %114
    %116 = vadd.xlane.f32.xlu0 %v39
    %v117 = vpop.xlane.xlu0 %116
    %118 = vadd.xlane.f32.xlu0 %v40
    %v119 = vpop.xlane.xlu0 %118
    %120 = vadd.xlane.f32.xlu0 %v41
    %v121 = vpop.xlane.xlu0 %120
    %122 = vadd.xlane.f32.xlu0 %v42
    %v123 = vpop.xlane.xlu0 %122
    %124 = vadd.xlane.f32.xlu0 %v43
    %v125 = vpop.xlane.xlu0 %124
    %126 = vadd.xlane.f32.xlu0 %v44
    %v127 = vpop.xlane.xlu0 %126
    %128 = vadd.xlane.f32.xlu0 %v45
    %v129 = vpop.xlane.xlu0 %128
    %130 = vadd.xlane.f32.xlu0 %v46
    %v131 = vpop.xlane.xlu0 %130
    %132 = vadd.xlane.f32.xlu0 %v47
    %v133 = vpop.xlane.xlu0 %132
    %134 = vadd.xlane.f32.xlu0 %v48
    %v135 = vpop.xlane.xlu0 %134
    %136 = vadd.xlane.f32.xlu0 %v49
    %v137 = vpop.xlane.xlu0 %136
    %138 = vadd.xlane.f32.xlu0 %v50
    %v139 = vpop.xlane.xlu0 %138
    %140 = vadd.xlane.f32.xlu0 %v51
    %v141 = vpop.xlane.xlu0 %140
    %142 = vadd.xlane.f32.xlu0 %v52
    %v143 = vpop.xlane.xlu0 %142
    %144 = vadd.xlane.f32.xlu0 %v53
    %v145 = vpop.xlane.xlu0 %144
    %146 = vadd.xlane.f32.xlu0 %v54
    %v147 = vpop.xlane.xlu0 %146
    %148 = vadd.xlane.f32.xlu0 %v55
    %v149 = vpop.xlane.xlu0 %148
    %150 = vadd.xlane.f32.xlu0 %v56
    %v151 = vpop.xlane.xlu0 %150
    %152 = vadd.xlane.f32.xlu0 %v57
    %v153 = vpop.xlane.xlu0 %152
    %154 = vadd.xlane.f32.xlu0 %v58
    %v155 = vpop.xlane.xlu0 %154
    %156 = vadd.xlane.f32.xlu0 %v59
    %v157 = vpop.xlane.xlu0 %156
    %158 = vadd.xlane.f32.xlu0 %v60
    %v159 = vpop.xlane.xlu0 %158
    %160 = vadd.xlane.f32.xlu0 %v61
    %v161 = vpop.xlane.xlu0 %160
    %162 = vadd.xlane.f32.xlu0 %v62
    %v163 = vpop.xlane.xlu0 %162
    %164 = vadd.xlane.f32.xlu0 %v63
    %v165 = vpop.xlane.xlu0 %164
    %166 = vadd.xlane.f32.xlu0 %v64
    %v167 = vpop.xlane.xlu0 %166
    %168 = vadd.xlane.f32.xlu0 %v65
    %v169 = vpop.xlane.xlu0 %168
    %170 = vadd.xlane.f32.xlu0 %v66
    %v171 = vpop.xlane.xlu0 %170
    %172 = vadd.xlane.f32.xlu0 %v67
    %v173 = vpop.xlane.xlu0 %172
    %174 = vadd.xlane.f32.xlu0 %v68
    %v175 = vpop.xlane.xlu0 %174
    %176 = vadd.xlane.f32.xlu0 %v69
    %v177 = vpop.xlane.xlu0 %176
    %178 = vadd.xlane.f32.xlu0 %v70
    %v179 = vpop.xlane.xlu0 %178
    %180 = vadd.xlane.f32.xlu0 %v71
    %v181 = vpop.xlane.xlu0 %180
    %182 = vadd.xlane.f32.xlu0 %v72
    %v183 = vpop.xlane.xlu0 %182
    %184 = vadd.xlane.f32.xlu0 %v73
    %v185 = vpop.xlane.xlu0 %184
    %186 = vadd.xlane.f32.xlu0 %v74
    %v187 = vpop.xlane.xlu0 %186
    %188 = vadd.xlane.f32.xlu0 %v75
    %v189 = vpop.xlane.xlu0 %188
    %190 = vadd.xlane.f32.xlu0 %v76
    %v191 = vpop.xlane.xlu0 %190
    %192 = vadd.xlane.f32.xlu0 %v77
    %v193 = vpop.xlane.xlu0 %192
    %194 = vadd.xlane.f32.xlu0 %v78
    %v195 = vpop.xlane.xlu0 %194
    %196 = vadd.xlane.f32.xlu0 %v79
    %v197 = vpop.xlane.xlu0 %196
    %198 = vadd.xlane.f32.xlu0 %v80
    %v199 = vpop.xlane.xlu0 %198
    %200 = vadd.xlane.f32.xlu0 %v81
    %v201 = vpop.xlane.xlu0 %200
    %202 = vadd.xlane.f32.xlu0 %v82
    %v203 = vpop.xlane.xlu0 %202
    %204 = vadd.xlane.f32.xlu0 %v83
    %v205 = vpop.xlane.xlu0 %204
    %206 = vadd.xlane.f32.xlu0 %v84
    %v207 = vpop.xlane.xlu0 %206
    %208 = vadd.xlane.f32.xlu0 %v85
    %v209 = vpop.xlane.xlu0 %208
    %210 = vadd.xlane.f32.xlu0 %v86
    %v211 = vpop.xlane.xlu0 %210
    %212 = vadd.xlane.f32.xlu0 %v87
    %v213 = vpop.xlane.xlu0 %212
    %214 = vadd.xlane.f32.xlu0 %v88
    %v215 = vpop.xlane.xlu0 %214
    %216 = vadd.xlane.f32.xlu0 %v89
    %v217 = vpop.xlane.xlu0 %216
    %v218 = vmul.f32 %v91, 0.25
    %v219 = vmul.f32 %v93, 0.25
    %v220 = vmul.f32 %v95, 0.25
    %v221 = vmul.f32 %v97, 0.25
    %v222 = vmul.f32 %v99, 0.25
    %v223 = vmul.f32 %v101, 0.25
    %v224 = vmul.f32 %v103, 0.25
    %v225 = vmul.f32 %v105, 0.25
    %v226 = vmul.f32 %v107, 0.25
    %v227 = vmul.f32 %v109, 0.25
    %v228 = vmul.f32 %v111, 0.25
    %v229 = vmul.f32 %v113, 0.25
    %v230 = vmul.f32 %v115, 0.25
    %v231 = vmul.f32 %v117, 0.25
    %v232 = vmul.f32 %v119, 0.25
    %v233 = vmul.f32 %v121, 0.25
    %v234 = vmul.f32 %v123, 0.25
    %v235 = vmul.f32 %v125, 0.25
    %v236 = vmul.f32 %v127, 0.25
    %v237 = vmul.f32 %v129, 0.25
    %v238 = vmul.f32 %v131, 0.25
    %v239 = vmul.f32 %v133, 0.25
    %v240 = vmul.f32 %v135, 0.25
    %v241 = vmul.f32 %v137, 0.25
    %v242 = vmul.f32 %v139, 0.25
    %v243 = vmul.f32 %v141, 0.25
    %v244 = vmul.f32 %v143, 0.25
    %v245 = vmul.f32 %v145, 0.25
    %v246 = vmul.f32 %v147, 0.25
    %v247 = vmul.f32 %v149, 0.25
    %v248 = vmul.f32 %v151, 0.25
    %v249 = vmul.f32 %v153, 0.25
    %v250 = vmul.f32 %v155, 0.25
    %v251 = vmul.f32 %v157, 0.25
    %v252 = vmul.f32 %v159, 0.25
    %v253 = vmul.f32 %v161, 0.25
    %v254 = vmul.f32 %v163, 0.25
    %v255 = vmul.f32 %v165, 0.25
    %v256 = vmul.f32 %v167, 0.25
    %v257 = vmul.f32 %v169, 0.25
    %v258 = vmul.f32 %v171, 0.25
    %v259 = vmul.f32 %v173, 0.25
    %v260 = vmul.f32 %v175, 0.25
    %v261 = vmul.f32 %v177, 0.25
    %v262 = vmul.f32 %v179, 0.25
    %v263 = vmul.f32 %v181, 0.25
    %v264 = vmul.f32 %v183, 0.25
    %v265 = vmul.f32 %v185, 0.25
    %v266 = vmul.f32 %v187, 0.25
    %v267 = vmul.f32 %v189, 0.25
    %v268 = vmul.f32 %v191, 0.25
    %v269 = vmul.f32 %v193, 0.25
    %v270 = vmul.f32 %v195, 0.25
    %v271 = vmul.f32 %v197, 0.25
    %v272 = vmul.f32 %v199, 0.25
    %v273 = vmul.f32 %v201, 0.25
    %v274 = vmul.f32 %v203, 0.25
    %v275 = vmul.f32 %v205, 0.25
    %v276 = vmul.f32 %v207, 0.25
    %v277 = vmul.f32 %v209, 0.25
    %v278 = vmul.f32 %v211, 0.25
    %v279 = vmul.f32 %v213, 0.25
    %v280 = vmul.f32 %v215, 0.25
    %v281 = vmul.f32 %v217, 0.25
    %v282 = vmul.f32 %v26, %v26
    %v283 = vmul.f32 %v27, %v27
    %v284 = vmul.f32 %v28, %v28
    %v285 = vmul.f32 %v29, %v29
    %v286 = vmul.f32 %v30, %v30
    %v287 = vmul.f32 %v31, %v31
    %v288 = vmul.f32 %v32, %v32
    %v289 = vmul.f32 %v33, %v33
    %v290 = vmul.f32 %v34, %v34
    %v291 = vmul.f32 %v35, %v35
    %v292 = vmul.f32 %v36, %v36
    %v293 = vmul.f32 %v37, %v37
    %v294 = vmul.f32 %v38, %v38
    %v295 = vmul.f32 %v39, %v39
    %v296 = vmul.f32 %v40, %v40
    %v297 = vmul.f32 %v41, %v41
    %v298 = vmul.f32 %v42, %v42
    %v299 = vmul.f32 %v43, %v43
    %v300 = vmul.f32 %v44, %v44
    %v301 = vmul.f32 %v45, %v45
    %v302 = vmul.f32 %v46, %v46
    %v303 = vmul.f32 %v47, %v47
    %v304 = vmul.f32 %v48, %v48
    %v305 = vmul.f32 %v49, %v49
    %v306 = vmul.f32 %v50, %v50
    %v307 = vmul.f32 %v51, %v51
    %v308 = vmul.f32 %v52, %v52
    %v309 = vmul.f32 %v53, %v53
    %v310 = vmul.f32 %v54, %v54
    %v311 = vmul.f32 %v55, %v55
    %v312 = vmul.f32 %v56, %v56
    %v313 = vmul.f32 %v57, %v57
    %v314 = vmul.f32 %v58, %v58
    %v315 = vmul.f32 %v59, %v59
    %v316 = vmul.f32 %v60, %v60
    %v317 = vmul.f32 %v61, %v61
    %v318 = vmul.f32 %v62, %v62
    %v319 = vmul.f32 %v63, %v63
    %v320 = vmul.f32 %v64, %v64
    %v321 = vmul.f32 %v65, %v65
    %v322 = vmul.f32 %v66, %v66
    %v323 = vmul.f32 %v67, %v67
    %v324 = vmul.f32 %v68, %v68
    %v325 = vmul.f32 %v69, %v69
    %v326 = vmul.f32 %v70, %v70
    %v327 = vmul.f32 %v71, %v71
    %v328 = vmul.f32 %v72, %v72
    %v329 = vmul.f32 %v73, %v73
    %v330 = vmul.f32 %v74, %v74
    %v331 = vmul.f32 %v75, %v75
    %v332 = vmul.f32 %v76, %v76
    %v333 = vmul.f32 %v77, %v77
    %v334 = vmul.f32 %v78, %v78
    %v335 = vmul.f32 %v79, %v79
    %v336 = vmul.f32 %v80, %v80
    %v337 = vmul.f32 %v81, %v81
    %v338 = vmul.f32 %v82, %v82
    %v339 = vmul.f32 %v83, %v83
    %v340 = vmul.f32 %v84, %v84
    %v341 = vmul.f32 %v85, %v85
    %v342 = vmul.f32 %v86, %v86
    %v343 = vmul.f32 %v87, %v87
    %v344 = vmul.f32 %v88, %v88
    %v345 = vmul.f32 %v89, %v89
    %346 = vadd.xlane.f32.xlu0 %v282
    %v347 = vpop.xlane.xlu0 %346
    %348 = vadd.xlane.f32.xlu0 %v283
    %v349 = vpop.xlane.xlu0 %348
    %350 = vadd.xlane.f32.xlu0 %v284
    %v351 = vpop.xlane.xlu0 %350
    %352 = vadd.xlane.f32.xlu0 %v285
    %v353 = vpop.xlane.xlu0 %352
    %354 = vadd.xlane.f32.xlu0 %v286
    %v355 = vpop.xlane.xlu0 %354
    %356 = vadd.xlane.f32.xlu0 %v287
    %v357 = vpop.xlane.xlu0 %356
    %358 = vadd.xlane.f32.xlu0 %v288
    %v359 = vpop.xlane.xlu0 %358
    %360 = vadd.xlane.f32.xlu0 %v289
    %v361 = vpop.xlane.xlu0 %360
    %362 = vadd.xlane.f32.xlu0 %v290
    %v363 = vpop.xlane.xlu0 %362
    %364 = vadd.xlane.f32.xlu0 %v291
    %v365 = vpop.xlane.xlu0 %364
    %366 = vadd.xlane.f32.xlu0 %v292
    %v367 = vpop.xlane.xlu0 %366
    %368 = vadd.xlane.f32.xlu0 %v293
    %v369 = vpop.xlane.xlu0 %368
    %370 = vadd.xlane.f32.xlu0 %v294
    %v371 = vpop.xlane.xlu0 %370
    %372 = vadd.xlane.f32.xlu0 %v295
    %v373 = vpop.xlane.xlu0 %372
    %374 = vadd.xlane.f32.xlu0 %v296
    %v375 = vpop.xlane.xlu0 %374
    %376 = vadd.xlane.f32.xlu0 %v297
    %v377 = vpop.xlane.xlu0 %376
    %378 = vadd.xlane.f32.xlu0 %v298
    %v379 = vpop.xlane.xlu0 %378
    %380 = vadd.xlane.f32.xlu0 %v299
    %v381 = vpop.xlane.xlu0 %380
    %382 = vadd.xlane.f32.xlu0 %v300
    %v383 = vpop.xlane.xlu0 %382
    %384 = vadd.xlane.f32.xlu0 %v301
    %v385 = vpop.xlane.xlu0 %384
    %386 = vadd.xlane.f32.xlu0 %v302
    %v387 = vpop.xlane.xlu0 %386
    %388 = vadd.xlane.f32.xlu0 %v303
    %v389 = vpop.xlane.xlu0 %388
    %390 = vadd.xlane.f32.xlu0 %v304
    %v391 = vpop.xlane.xlu0 %390
    %392 = vadd.xlane.f32.xlu0 %v305
    %v393 = vpop.xlane.xlu0 %392
    %394 = vadd.xlane.f32.xlu0 %v306
    %v395 = vpop.xlane.xlu0 %394
    %396 = vadd.xlane.f32.xlu0 %v307
    %v397 = vpop.xlane.xlu0 %396
    %398 = vadd.xlane.f32.xlu0 %v308
    %v399 = vpop.xlane.xlu0 %398
    %400 = vadd.xlane.f32.xlu0 %v309
    %v401 = vpop.xlane.xlu0 %400
    %402 = vadd.xlane.f32.xlu0 %v310
    %v403 = vpop.xlane.xlu0 %402
    %404 = vadd.xlane.f32.xlu0 %v311
    %v405 = vpop.xlane.xlu0 %404
    %406 = vadd.xlane.f32.xlu0 %v312
    %v407 = vpop.xlane.xlu0 %406
    %408 = vadd.xlane.f32.xlu0 %v313
    %v409 = vpop.xlane.xlu0 %408
    %410 = vadd.xlane.f32.xlu0 %v314
    %v411 = vpop.xlane.xlu0 %410
    %412 = vadd.xlane.f32.xlu0 %v315
    %v413 = vpop.xlane.xlu0 %412
    %414 = vadd.xlane.f32.xlu0 %v316
    %v415 = vpop.xlane.xlu0 %414
    %416 = vadd.xlane.f32.xlu0 %v317
    %v417 = vpop.xlane.xlu0 %416
    %418 = vadd.xlane.f32.xlu0 %v318
    %v419 = vpop.xlane.xlu0 %418
    %420 = vadd.xlane.f32.xlu0 %v319
    %v421 = vpop.xlane.xlu0 %420
    %422 = vadd.xlane.f32.xlu0 %v320
    %v423 = vpop.xlane.xlu0 %422
    %424 = vadd.xlane.f32.xlu0 %v321
    %v425 = vpop.xlane.xlu0 %424
    %426 = vadd.xlane.f32.xlu0 %v322
    %v427 = vpop.xlane.xlu0 %426
    %428 = vadd.xlane.f32.xlu0 %v323
    %v429 = vpop.xlane.xlu0 %428
    %430 = vadd.xlane.f32.xlu0 %v324
    %v431 = vpop.xlane.xlu0 %430
    %432 = vadd.xlane.f32.xlu0 %v325
    %v433 = vpop.xlane.xlu0 %432
    %434 = vadd.xlane.f32.xlu0 %v326
    %v435 = vpop.xlane.xlu0 %434
    %436 = vadd.xlane.f32.xlu0 %v327
    %v437 = vpop.xlane.xlu0 %436
    %438 = vadd.xlane.f32.xlu0 %v328
    %v439 = vpop.xlane.xlu0 %438
    %440 = vadd.xlane.f32.xlu0 %v329
    %v441 = vpop.xlane.xlu0 %440
    %442 = vadd.xlane.f32.xlu0 %v330
    %v443 = vpop.xlane.xlu0 %442
    %444 = vadd.xlane.f32.xlu0 %v331
    %v445 = vpop.xlane.xlu0 %444
    %446 = vadd.xlane.f32.xlu0 %v332
    %v447 = vpop.xlane.xlu0 %446
    %448 = vadd.xlane.f32.xlu0 %v333
    %v449 = vpop.xlane.xlu0 %448
    %450 = vadd.xlane.f32.xlu0 %v334
    %v451 = vpop.xlane.xlu0 %450
    %452 = vadd.xlane.f32.xlu0 %v335
    %v453 = vpop.xlane.xlu0 %452
    %454 = vadd.xlane.f32.xlu0 %v336
    %v455 = vpop.xlane.xlu0 %454
    %456 = vadd.xlane.f32.xlu0 %v337
    %v457 = vpop.xlane.xlu0 %456
    %458 = vadd.xlane.f32.xlu0 %v338
    %v459 = vpop.xlane.xlu0 %458
    %460 = vadd.xlane.f32.xlu0 %v339
    %v461 = vpop.xlane.xlu0 %460
    %462 = vadd.xlane.f32.xlu0 %v340
    %v463 = vpop.xlane.xlu0 %462
    %464 = vadd.xlane.f32.xlu0 %v341
    %v465 = vpop.xlane.xlu0 %464
    %466 = vadd.xlane.f32.xlu0 %v342
    %v467 = vpop.xlane.xlu0 %466
    %468 = vadd.xlane.f32.xlu0 %v343
    %v469 = vpop.xlane.xlu0 %468
    %470 = vadd.xlane.f32.xlu0 %v344
    %v471 = vpop.xlane.xlu0 %470
    %472 = vadd.xlane.f32.xlu0 %v345
    %v473 = vpop.xlane.xlu0 %472
    %v474 = vmul.f32 %v347, 0.25
    %v475 = vmul.f32 %v349, 0.25
    %v476 = vmul.f32 %v351, 0.25
    %v477 = vmul.f32 %v353, 0.25
    %v478 = vmul.f32 %v355, 0.25
    %v479 = vmul.f32 %v357, 0.25
    %v480 = vmul.f32 %v359, 0.25
    %v481 = vmul.f32 %v361, 0.25
    %v482 = vmul.f32 %v363, 0.25
    %v483 = vmul.f32 %v365, 0.25
    %v484 = vmul.f32 %v367, 0.25
    %v485 = vmul.f32 %v369, 0.25
    %v486 = vmul.f32 %v371, 0.25
    %v487 = vmul.f32 %v373, 0.25
    %v488 = vmul.f32 %v375, 0.25
    %v489 = vmul.f32 %v377, 0.25
    %v490 = vmul.f32 %v379, 0.25
    %v491 = vmul.f32 %v381, 0.25
    %v492 = vmul.f32 %v383, 0.25
    %v493 = vmul.f32 %v385, 0.25
    %v494 = vmul.f32 %v387, 0.25
    %v495 = vmul.f32 %v389, 0.25
    %v496 = vmul.f32 %v391, 0.25
    %v497 = vmul.f32 %v393, 0.25
    %v498 = vmul.f32 %v395, 0.25
    %v499 = vmul.f32 %v397, 0.25
    %v500 = vmul.f32 %v399, 0.25
    %v501 = vmul.f32 %v401, 0.25
    %v502 = vmul.f32 %v403, 0.25
    %v503 = vmul.f32 %v405, 0.25
    %v504 = vmul.f32 %v407, 0.25
    %v505 = vmul.f32 %v409, 0.25
    %v506 = vmul.f32 %v411, 0.25
    %v507 = vmul.f32 %v413, 0.25
    %v508 = vmul.f32 %v415, 0.25
    %v509 = vmul.f32 %v417, 0.25
    %v510 = vmul.f32 %v419, 0.25
    %v511 = vmul.f32 %v421, 0.25
    %v512 = vmul.f32 %v423, 0.25
    %v513 = vmul.f32 %v425, 0.25
    %v514 = vmul.f32 %v427, 0.25
    %v515 = vmul.f32 %v429, 0.25
    %v516 = vmul.f32 %v431, 0.25
    %v517 = vmul.f32 %v433, 0.25
    %v518 = vmul.f32 %v435, 0.25
    %v519 = vmul.f32 %v437, 0.25
    %v520 = vmul.f32 %v439, 0.25
    %v521 = vmul.f32 %v441, 0.25
    %v522 = vmul.f32 %v443, 0.25
    %v523 = vmul.f32 %v445, 0.25
    %v524 = vmul.f32 %v447, 0.25
    %v525 = vmul.f32 %v449, 0.25
    %v526 = vmul.f32 %v451, 0.25
    %v527 = vmul.f32 %v453, 0.25
    %v528 = vmul.f32 %v455, 0.25
    %v529 = vmul.f32 %v457, 0.25
    %v530 = vmul.f32 %v459, 0.25
    %v531 = vmul.f32 %v461, 0.25
    %v532 = vmul.f32 %v463, 0.25
    %v533 = vmul.f32 %v465, 0.25
    %v534 = vmul.f32 %v467, 0.25
    %v535 = vmul.f32 %v469, 0.25
    %v536 = vmul.f32 %v471, 0.25
    %v537 = vmul.f32 %v473, 0.25
    %v538 = vmul.f32 %v218, %v218
    %v539 = vmul.f32 %v219, %v219
    %v540 = vmul.f32 %v220, %v220
    %v541 = vmul.f32 %v221, %v221
    %v542 = vmul.f32 %v222, %v222
    %v543 = vmul.f32 %v223, %v223
    %v544 = vmul.f32 %v224, %v224
    %v545 = vmul.f32 %v225, %v225
    %v546 = vmul.f32 %v226, %v226
    %v547 = vmul.f32 %v227, %v227
    %v548 = vmul.f32 %v228, %v228
    %v549 = vmul.f32 %v229, %v229
    %v550 = vmul.f32 %v230, %v230
    %v551 = vmul.f32 %v231, %v231
    %v552 = vmul.f32 %v232, %v232
    %v553 = vmul.f32 %v233, %v233
    %v554 = vmul.f32 %v234, %v234
    %v555 = vmul.f32 %v235, %v235
    %v556 = vmul.f32 %v236, %v236
    %v557 = vmul.f32 %v237, %v237
    %v558 = vmul.f32 %v238, %v238
    %v559 = vmul.f32 %v239, %v239
    %v560 = vmul.f32 %v240, %v240
    %v561 = vmul.f32 %v241, %v241
    %v562 = vmul.f32 %v242, %v242
    %v563 = vmul.f32 %v243, %v243
    %v564 = vmul.f32 %v244, %v244
    %v565 = vmul.f32 %v245, %v245
    %v566 = vmul.f32 %v246, %v246
    %v567 = vmul.f32 %v247, %v247
    %v568 = vmul.f32 %v248, %v248
    %v569 = vmul.f32 %v249, %v249
    %v570 = vmul.f32 %v250, %v250
    %v571 = vmul.f32 %v251, %v251
    %v572 = vmul.f32 %v252, %v252
    %v573 = vmul.f32 %v253, %v253
    %v574 = vmul.f32 %v254, %v254
    %v575 = vmul.f32 %v255, %v255
    %v576 = vmul.f32 %v256, %v256
    %v577 = vmul.f32 %v257, %v257
    %v578 = vmul.f32 %v258, %v258
    %v579 = vmul.f32 %v259, %v259
    %v580 = vmul.f32 %v260, %v260
    %v581 = vmul.f32 %v261, %v261
    %v582 = vmul.f32 %v262, %v262
    %v583 = vmul.f32 %v263, %v263
    %v584 = vmul.f32 %v264, %v264
    %v585 = vmul.f32 %v265, %v265
    %v586 = vmul.f32 %v266, %v266
    %v587 = vmul.f32 %v267, %v267
    %v588 = vmul.f32 %v268, %v268
    %v589 = vmul.f32 %v269, %v269
    %v590 = vmul.f32 %v270, %v270
    %v591 = vmul.f32 %v271, %v271
    %v592 = vmul.f32 %v272, %v272
    %v593 = vmul.f32 %v273, %v273
    %v594 = vmul.f32 %v274, %v274
    %v595 = vmul.f32 %v275, %v275
    %v596 = vmul.f32 %v276, %v276
    %v597 = vmul.f32 %v277, %v277
    %v598 = vmul.f32 %v278, %v278
    %v599 = vmul.f32 %v279, %v279
    %v600 = vmul.f32 %v280, %v280
    %v601 = vmul.f32 %v281, %v281
    %v602 = vsub.f32 %v474, %v538
    %v603 = vsub.f32 %v475, %v539
    %v604 = vsub.f32 %v476, %v540
    %v605 = vsub.f32 %v477, %v541
    %v606 = vsub.f32 %v478, %v542
    %v607 = vsub.f32 %v479, %v543
    %v608 = vsub.f32 %v480, %v544
    %v609 = vsub.f32 %v481, %v545
    %v610 = vsub.f32 %v482, %v546
    %v611 = vsub.f32 %v483, %v547
    %v612 = vsub.f32 %v484, %v548
    %v613 = vsub.f32 %v485, %v549
    %v614 = vsub.f32 %v486, %v550
    %v615 = vsub.f32 %v487, %v551
    %v616 = vsub.f32 %v488, %v552
    %v617 = vsub.f32 %v489, %v553
    %v618 = vsub.f32 %v490, %v554
    %v619 = vsub.f32 %v491, %v555
    %v620 = vsub.f32 %v492, %v556
    %v621 = vsub.f32 %v493, %v557
    %v622 = vsub.f32 %v494, %v558
    %v623 = vsub.f32 %v495, %v559
    %v624 = vsub.f32 %v496, %v560
    %v625 = vsub.f32 %v497, %v561
    %v626 = vsub.f32 %v498, %v562
    %v627 = vsub.f32 %v499, %v563
    %v628 = vsub.f32 %v500, %v564
    %v629 = vsub.f32 %v501, %v565
    %v630 = vsub.f32 %v502, %v566
    %v631 = vsub.f32 %v503, %v567
    %v632 = vsub.f32 %v504, %v568
    %v633 = vsub.f32 %v505, %v569
    %v634 = vsub.f32 %v506, %v570
    %v635 = vsub.f32 %v507, %v571
    %v636 = vsub.f32 %v508, %v572
    %v637 = vsub.f32 %v509, %v573
    %v638 = vsub.f32 %v510, %v574
    %v639 = vsub.f32 %v511, %v575
    %v640 = vsub.f32 %v512, %v576
    %v641 = vsub.f32 %v513, %v577
    %v642 = vsub.f32 %v514, %v578
    %v643 = vsub.f32 %v515, %v579
    %v644 = vsub.f32 %v516, %v580
    %v645 = vsub.f32 %v517, %v581
    %v646 = vsub.f32 %v518, %v582
    %v647 = vsub.f32 %v519, %v583
    %v648 = vsub.f32 %v520, %v584
    %v649 = vsub.f32 %v521, %v585
    %v650 = vsub.f32 %v522, %v586
    %v651 = vsub.f32 %v523, %v587
    %v652 = vsub.f32 %v524, %v588
    %v653 = vsub.f32 %v525, %v589
    %v654 = vsub.f32 %v526, %v590
    %v655 = vsub.f32 %v527, %v591
    %v656 = vsub.f32 %v528, %v592
    %v657 = vsub.f32 %v529, %v593
    %v658 = vsub.f32 %v530, %v594
    %v659 = vsub.f32 %v531, %v595
    %v660 = vsub.f32 %v532, %v596
    %v661 = vsub.f32 %v533, %v597
    %v662 = vsub.f32 %v534, %v598
    %v663 = vsub.f32 %v535, %v599
    %v664 = vsub.f32 %v536, %v600
    %v665 = vsub.f32 %v537, %v601
    %v666 = vadd.f32 %v602, 1e-05
    %v667 = vadd.f32 %v603, 1e-05
    %v668 = vadd.f32 %v604, 1e-05
    %v669 = vadd.f32 %v605, 1e-05
    %v670 = vadd.f32 %v606, 1e-05
    %v671 = vadd.f32 %v607, 1e-05
    %v672 = vadd.f32 %v608, 1e-05
    %v673 = vadd.f32 %v609, 1e-05
    %v674 = vadd.f32 %v610, 1e-05
    %v675 = vadd.f32 %v611, 1e-05
    %v676 = vadd.f32 %v612, 1e-05
    %v677 = vadd.f32 %v613, 1e-05
    %v678 = vadd.f32 %v614, 1e-05
    %v679 = vadd.f32 %v615, 1e-05
    %v680 = vadd.f32 %v616, 1e-05
    %v681 = vadd.f32 %v617, 1e-05
    %v682 = vadd.f32 %v618, 1e-05
    %v683 = vadd.f32 %v619, 1e-05
    %v684 = vadd.f32 %v620, 1e-05
    %v685 = vadd.f32 %v621, 1e-05
    %v686 = vadd.f32 %v622, 1e-05
    %v687 = vadd.f32 %v623, 1e-05
    %v688 = vadd.f32 %v624, 1e-05
    %v689 = vadd.f32 %v625, 1e-05
    %v690 = vadd.f32 %v626, 1e-05
    %v691 = vadd.f32 %v627, 1e-05
    %v692 = vadd.f32 %v628, 1e-05
    %v693 = vadd.f32 %v629, 1e-05
    %v694 = vadd.f32 %v630, 1e-05
    %v695 = vadd.f32 %v631, 1e-05
    %v696 = vadd.f32 %v632, 1e-05
    %v697 = vadd.f32 %v633, 1e-05
    %v698 = vadd.f32 %v634, 1e-05
    %v699 = vadd.f32 %v635, 1e-05
    %v700 = vadd.f32 %v636, 1e-05
    %v701 = vadd.f32 %v637, 1e-05
    %v702 = vadd.f32 %v638, 1e-05
    %v703 = vadd.f32 %v639, 1e-05
    %v704 = vadd.f32 %v640, 1e-05
    %v705 = vadd.f32 %v641, 1e-05
    %v706 = vadd.f32 %v642, 1e-05
    %v707 = vadd.f32 %v643, 1e-05
    %v708 = vadd.f32 %v644, 1e-05
    %v709 = vadd.f32 %v645, 1e-05
    %v710 = vadd.f32 %v646, 1e-05
    %v711 = vadd.f32 %v647, 1e-05
    %v712 = vadd.f32 %v648, 1e-05
    %v713 = vadd.f32 %v649, 1e-05
    %v714 = vadd.f32 %v650, 1e-05
    %v715 = vadd.f32 %v651, 1e-05
    %v716 = vadd.f32 %v652, 1e-05
    %v717 = vadd.f32 %v653, 1e-05
    %v718 = vadd.f32 %v654, 1e-05
    %v719 = vadd.f32 %v655, 1e-05
    %v720 = vadd.f32 %v656, 1e-05
    %v721 = vadd.f32 %v657, 1e-05
    %v722 = vadd.f32 %v658, 1e-05
    %v723 = vadd.f32 %v659, 1e-05
    %v724 = vadd.f32 %v660, 1e-05
    %v725 = vadd.f32 %v661, 1e-05
    %v726 = vadd.f32 %v662, 1e-05
    %v727 = vadd.f32 %v663, 1e-05
    %v728 = vadd.f32 %v664, 1e-05
    %v729 = vadd.f32 %v665, 1e-05
    %v730 = vrsqrt.pop %v666
    %v731 = vrsqrt.pop %v667
    %v732 = vrsqrt.pop %v668
    %v733 = vrsqrt.pop %v669
    %v734 = vrsqrt.pop %v670
    %v735 = vrsqrt.pop %v671
    %v736 = vrsqrt.pop %v672
    %v737 = vrsqrt.pop %v673
    %v738 = vrsqrt.pop %v674
    %v739 = vrsqrt.pop %v675
    %v740 = vrsqrt.pop %v676
    %v741 = vrsqrt.pop %v677
    %v742 = vrsqrt.pop %v678
    %v743 = vrsqrt.pop %v679
    %v744 = vrsqrt.pop %v680
    %v745 = vrsqrt.pop %v681
    %v746 = vrsqrt.pop %v682
    %v747 = vrsqrt.pop %v683
    %v748 = vrsqrt.pop %v684
    %v749 = vrsqrt.pop %v685
    %v750 = vrsqrt.pop %v686
    %v751 = vrsqrt.pop %v687
    %v752 = vrsqrt.pop %v688
    %v753 = vrsqrt.pop %v689
    %v754 = vrsqrt.pop %v690
    %v755 = vrsqrt.pop %v691
    %v756 = vrsqrt.pop %v692
    %v757 = vrsqrt.pop %v693
    %v758 = vrsqrt.pop %v694
    %v759 = vrsqrt.pop %v695
    %v760 = vrsqrt.pop %v696
    %v761 = vrsqrt.pop %v697
    %v762 = vrsqrt.pop %v698
    %v763 = vrsqrt.pop %v699
    %v764 = vrsqrt.pop %v700
    %v765 = vrsqrt.pop %v701
    %v766 = vrsqrt.pop %v702
    %v767 = vrsqrt.pop %v703
    %v768 = vrsqrt.pop %v704
    %v769 = vrsqrt.pop %v705
    %v770 = vrsqrt.pop %v706
    %v771 = vrsqrt.pop %v707
    %v772 = vrsqrt.pop %v708
    %v773 = vrsqrt.pop %v709
    %v774 = vrsqrt.pop %v710
    %v775 = vrsqrt.pop %v711
    %v776 = vrsqrt.pop %v712
    %v777 = vrsqrt.pop %v713
    %v778 = vrsqrt.pop %v714
    %v779 = vrsqrt.pop %v715
    %v780 = vrsqrt.pop %v716
    %v781 = vrsqrt.pop %v717
    %v782 = vrsqrt.pop %v718
    %v783 = vrsqrt.pop %v719
    %v784 = vrsqrt.pop %v720
    %v785 = vrsqrt.pop %v721
    %v786 = vrsqrt.pop %v722
    %v787 = vrsqrt.pop %v723
    %v788 = vrsqrt.pop %v724
    %v789 = vrsqrt.pop %v725
    %v790 = vrsqrt.pop %v726
    %v791 = vrsqrt.pop %v727
    %v792 = vrsqrt.pop %v728
    %v793 = vrsqrt.pop %v729
    %v794 = vld [vmem:[%s1] sm:$0x1]
    %v795 = vmul.f32 %v26, %v730
    %v796 = vmul.f32 %v27, %v731
    %v797 = vmul.f32 %v28, %v732
    %v798 = vmul.f32 %v29, %v733
    %v799 = vmul.f32 %v30, %v734
    %v800 = vmul.f32 %v31, %v735
    %v801 = vmul.f32 %v32, %v736
    %v802 = vmul.f32 %v33, %v737
    %v803 = vmul.f32 %v34, %v738
    %v804 = vmul.f32 %v35, %v739
    %v805 = vmul.f32 %v36, %v740
    %v806 = vmul.f32 %v37, %v741
    %v807 = vmul.f32 %v38, %v742
    %v808 = vmul.f32 %v39, %v743
    %v809 = vmul.f32 %v40, %v744
    %v810 = vmul.f32 %v41, %v745
    %v811 = vmul.f32 %v42, %v746
    %v812 = vmul.f32 %v43, %v747
    %v813 = vmul.f32 %v44, %v748
    %v814 = vmul.f32 %v45, %v749
    %v815 = vmul.f32 %v46, %v750
    %v816 = vmul.f32 %v47, %v751
    %v817 = vmul.f32 %v48, %v752
    %v818 = vmul.f32 %v49, %v753
    %v819 = vmul.f32 %v50, %v754
    %v820 = vmul.f32 %v51, %v755
    %v821 = vmul.f32 %v52, %v756
    %v822 = vmul.f32 %v53, %v757
    %v823 = vmul.f32 %v54, %v758
    %v824 = vmul.f32 %v55, %v759
    %v825 = vmul.f32 %v56, %v760
    %v826 = vmul.f32 %v57, %v761
    %v827 = vmul.f32 %v58, %v762
    %v828 = vmul.f32 %v59, %v763
    %v829 = vmul.f32 %v60, %v764
    %v830 = vmul.f32 %v61, %v765
    %v831 = vmul.f32 %v62, %v766
    %v832 = vmul.f32 %v63, %v767
    %v833 = vmul.f32 %v64, %v768
    %v834 = vmul.f32 %v65, %v769
    %v835 = vmul.f32 %v66, %v770
    %v836 = vmul.f32 %v67, %v771
    %v837 = vmul.f32 %v68, %v772
    %v838 = vmul.f32 %v69, %v773
    %v839 = vmul.f32 %v70, %v774
    %v840 = vmul.f32 %v71, %v775
    %v841 = vmul.f32 %v72, %v776
    %v842 = vmul.f32 %v73, %v777
    %v843 = vmul.f32 %v74, %v778
    %v844 = vmul.f32 %v75, %v779
    %v845 = vmul.f32 %v76, %v780
    %v846 = vmul.f32 %v77, %v781
    %v847 = vmul.f32 %v78, %v782
    %v848 = vmul.f32 %v79, %v783
    %v849 = vmul.f32 %v80, %v784
    %v850 = vmul.f32 %v81, %v785
    %v851 = vmul.f32 %v82, %v786
    %v852 = vmul.f32 %v83, %v787
    %v853 = vmul.f32 %v84, %v788
    %v854 = vmul.f32 %v85, %v789
    %v855 = vmul.f32 %v86, %v790
    %v856 = vmul.f32 %v87, %v791
    %v857 = vmul.f32 %v88, %v792
    %v858 = vmul.f32 %v89, %v793
    %v860 = vlaneseq
    %v861 = vshrl.u32 %v860, 7
    %v862 = vsub.s32 0, %v861
    %v863 = vrot.slane %v794, %v862
    %v865 = vmul.f32 %v795, %v863
    %v866 = vmul.f32 %v796, %v863
    %v867 = vmul.f32 %v797, %v863
    %v868 = vmul.f32 %v798, %v863
    %v869 = vmul.f32 %v799, %v863
    %v870 = vmul.f32 %v800, %v863
    %v871 = vmul.f32 %v801, %v863
    %v872 = vmul.f32 %v802, %v863
    %v873 = vmul.f32 %v803, %v863
    %v874 = vmul.f32 %v804, %v863
    %v875 = vmul.f32 %v805, %v863
    %v876 = vmul.f32 %v806, %v863
    %v877 = vmul.f32 %v807, %v863
    %v878 = vmul.f32 %v808, %v863
    %v879 = vmul.f32 %v809, %v863
    %v880 = vmul.f32 %v810, %v863
    %v881 = vmul.f32 %v811, %v863
    %v882 = vmul.f32 %v812, %v863
    %v883 = vmul.f32 %v813, %v863
    %v884 = vmul.f32 %v814, %v863
    %v885 = vmul.f32 %v815, %v863
    %v886 = vmul.f32 %v816, %v863
    %v887 = vmul.f32 %v817, %v863
    %v888 = vmul.f32 %v818, %v863
    %v889 = vmul.f32 %v819, %v863
    %v890 = vmul.f32 %v820, %v863
    %v891 = vmul.f32 %v821, %v863
    %v892 = vmul.f32 %v822, %v863
    %v893 = vmul.f32 %v823, %v863
    %v894 = vmul.f32 %v824, %v863
    %v895 = vmul.f32 %v825, %v863
    %v896 = vmul.f32 %v826, %v863
    %v897 = vmul.f32 %v827, %v863
    %v898 = vmul.f32 %v828, %v863
    %v899 = vmul.f32 %v829, %v863
    %v900 = vmul.f32 %v830, %v863
    %v901 = vmul.f32 %v831, %v863
    %v902 = vmul.f32 %v832, %v863
    %v903 = vmul.f32 %v833, %v863
    %v904 = vmul.f32 %v834, %v863
    %v905 = vmul.f32 %v835, %v863
    %v906 = vmul.f32 %v836, %v863
    %v907 = vmul.f32 %v837, %v863
    %v908 = vmul.f32 %v838, %v863
    %v909 = vmul.f32 %v839, %v863
    %v910 = vmul.f32 %v840, %v863
    %v911 = vmul.f32 %v841, %v863
    %v912 = vmul.f32 %v842, %v863
    %v913 = vmul.f32 %v843, %v863
    %v914 = vmul.f32 %v844, %v863
    %v915 = vmul.f32 %v845, %v863
    %v916 = vmul.f32 %v846, %v863
    %v917 = vmul.f32 %v847, %v863
    %v918 = vmul.f32 %v848, %v863
    %v919 = vmul.f32 %v849, %v863
    %v920 = vmul.f32 %v850, %v863
    %v921 = vmul.f32 %v851, %v863
    %v922 = vmul.f32 %v852, %v863
    %v923 = vmul.f32 %v853, %v863
    %v924 = vmul.f32 %v854, %v863
    %v925 = vmul.f32 %v855, %v863
    %v926 = vmul.f32 %v856, %v863
    %v927 = vmul.f32 %v857, %v863
    %v928 = vmul.f32 %v858, %v863
    %929 = vst [vmem:[#allocation5] sm:$0xff] %v865
    %930 = vst [vmem:[#allocation5 + $0x8] sm:$0xff] %v866
    %931 = vst [vmem:[#allocation5 + $0x10] sm:$0xff] %v867
    %932 = vst [vmem:[#allocation5 + $0x18] sm:$0xff] %v868
    %933 = vst [vmem:[#allocation5 + $0x20] sm:$0xff] %v869
    %934 = vst [vmem:[#allocation5 + $0x28] sm:$0xff] %v870
    %935 = vst [vmem:[#allocation5 + $0x30] sm:$0xff] %v871
    %936 = vst [vmem:[#allocation5 + $0x38] sm:$0xff] %v872
    %937 = vst [vmem:[#allocation5 + $0x40] sm:$0xff] %v873
    %938 = vst [vmem:[#allocation5 + $0x48] sm:$0xff] %v874
    %939 = vst [vmem:[#allocation5 + $0x50] sm:$0xff] %v875
    %940 = vst [vmem:[#allocation5 + $0x58] sm:$0xff] %v876
    %941 = vst [vmem:[#allocation5 + $0x60] sm:$0xff] %v877
    %942 = vst [vmem:[#allocation5 + $0x68] sm:$0xff] %v878
    %943 = vst [vmem:[#allocation5 + $0x70] sm:$0xff] %v879
    %944 = vst [vmem:[#allocation5 + $0x78] sm:$0xff] %v880
    %945 = vst [vmem:[#allocation5 + $0x80] sm:$0xff] %v881
    %946 = vst [vmem:[#allocation5 + $0x88] sm:$0xff] %v882
    %947 = vst [vmem:[#allocation5 + $0x90] sm:$0xff] %v883
    %948 = vst [vmem:[#allocation5 + $0x98] sm:$0xff] %v884
    %949 = vst [vmem:[#allocation5 + $0xa0] sm:$0xff] %v885
    %950 = vst [vmem:[#allocation5 + $0xa8] sm:$0xff] %v886
    %951 = vst [vmem:[#allocation5 + $0xb0] sm:$0xff] %v887
    %952 = vst [vmem:[#allocation5 + $0xb8] sm:$0xff] %v888
    %953 = vst [vmem:[#allocation5 + $0xc0] sm:$0xff] %v889
    %954 = vst [vmem:[#allocation5 + $0xc8] sm:$0xff] %v890
    %955 = vst [vmem:[#allocation5 + $0xd0] sm:$0xff] %v891
    %956 = vst [vmem:[#allocation5 + $0xd8] sm:$0xff] %v892
    %957 = vst [vmem:[#allocation5 + $0xe0] sm:$0xff] %v893
    %958 = vst [vmem:[#allocation5 + $0xe8] sm:$0xff] %v894
    %959 = vst [vmem:[#allocation5 + $0xf0] sm:$0xff] %v895
    %960 = vst [vmem:[#allocation5 + $0xf8] sm:$0xff] %v896
    %961 = vst [vmem:[#allocation5 + $0x100] sm:$0xff] %v897
    %962 = vst [vmem:[#allocation5 + $0x108] sm:$0xff] %v898
    %963 = vst [vmem:[#allocation5 + $0x110] sm:$0xff] %v899
    %964 = vst [vmem:[#allocation5 + $0x118] sm:$0xff] %v900
    %965 = vst [vmem:[#allocation5 + $0x120] sm:$0xff] %v901
    %966 = vst [vmem:[#allocation5 + $0x128] sm:$0xff] %v902
    %967 = vst [vmem:[#allocation5 + $0x130] sm:$0xff] %v903
    %968 = vst [vmem:[#allocation5 + $0x138] sm:$0xff] %v904
    %969 = vst [vmem:[#allocation5 + $0x140] sm:$0xff] %v905
    %970 = vst [vmem:[#allocation5 + $0x148] sm:$0xff] %v906
    %971 = vst [vmem:[#allocation5 + $0x150] sm:$0xff] %v907
    %972 = vst [vmem:[#allocation5 + $0x158] sm:$0xff] %v908
    %973 = vst [vmem:[#allocation5 + $0x160] sm:$0xff] %v909
    %974 = vst [vmem:[#allocation5 + $0x168] sm:$0xff] %v910
    %975 = vst [vmem:[#allocation5 + $0x170] sm:$0xff] %v911
    %976 = vst [vmem:[#allocation5 + $0x178] sm:$0xff] %v912
    %977 = vst [vmem:[#allocation5 + $0x180] sm:$0xff] %v913
    %978 = vst [vmem:[#allocation5 + $0x188] sm:$0xff] %v914
    %979 = vst [vmem:[#allocation5 + $0x190] sm:$0xff] %v915
    %980 = vst [vmem:[#allocation5 + $0x198] sm:$0xff] %v916
    %981 = vst [vmem:[#allocation5 + $0x1a0] sm:$0xff] %v917
    %982 = vst [vmem:[#allocation5 + $0x1a8] sm:$0xff] %v918
    %983 = vst [vmem:[#allocation5 + $0x1b0] sm:$0xff] %v919
    %984 = vst [vmem:[#allocation5 + $0x1b8] sm:$0xff] %v920
    %985 = vst [vmem:[#allocation5 + $0x1c0] sm:$0xff] %v921
    %986 = vst [vmem:[#allocation5 + $0x1c8] sm:$0xff] %v922
    %987 = vst [vmem:[#allocation5 + $0x1d0] sm:$0xff] %v923
    %988 = vst [vmem:[#allocation5 + $0x1d8] sm:$0xff] %v924
    %989 = vst [vmem:[#allocation5 + $0x1e0] sm:$0xff] %v925
    %990 = vst [vmem:[#allocation5 + $0x1e8] sm:$0xff] %v926
    %991 = vst [vmem:[#allocation5 + $0x1f0] sm:$0xff] %v927
    %992 = vst [vmem:[#allocation5 + $0x1f8] sm:$0xff] %v928
    // Predicated region
    $region14: #{tpu_custom_call.1} parent=1 // pred_check
      _
    $region15: #{tpu_custom_call.1} parent=1 // pred_check_branch
      %994 = sbr.rel (0) target = $region17
    $region16: #{tpu_custom_call.1} parent=1 // pred_region
      %s996 = ssub.s32 8192, 8192
      %997 = vsyncadd [#allocation4], %s996
      %s998 = sshll.u32 [#allocation5], 4
      %s999 = int_to_ptr.vmem [resolvable:$true] %s998
      %1004 = dma.vmem_to_hbm [thread:$0]  %s999, 8192, %s2, [#allocation4], 128, 128, 8
    $region17: #{tpu_custom_call.1} parent=1 // pred_fallthru
      _
    // Predicated region
    $region18: #{tpu_custom_call.1} parent=1 // pred_check
      _
    $region19: #{tpu_custom_call.1} parent=1 // pred_check_branch
      %1006 = sbr.rel (0) target = $region21
    $region20: #{tpu_custom_call.1} parent=1 // pred_region
      %1007 = dma.done [#allocation4], 8192
    $region21: #{tpu_custom_call.1} parent=1 // pred_fallthru
      _
    %1008 = vsyncpa [#allocation3], 1
    %1009 = vsyncpa [#allocation4], 1

</llo_original>
